<compile_context>
chip_gen: v5e
topology: v5e:2x2
jax: 0.10.0
libtpu: 0.0.40
codegen_flags: <defaults>
</compile_context>

<pallas_src>
import functools

import jax
import jax.numpy as jnp
from jax.experimental import pallas as pl
from jax.experimental.pallas import tpu as pltpu

D_MODEL = 128            # lane-dense: last dim maps onto the 128-lane axis
DROPOUT_P = 0.5
LN_EPS = 1e-5            # nn.LayerNorm default
MAX_ROW_TILE = 1024      # 1024 x 128 f32 = 512 KiB/slab -> ~3 MiB working set (fused train)
VMEM_LIMIT = 48 * 1024 * 1024   # explicit scoped-VMEM budget; safe on v5e/v6e/v7x

_HIGHEST = jax.lax.Precision.HIGHEST


# ------------------------------------------------------------------ helpers --
def _compiler_params():
    return pltpu.CompilerParams(
        dimension_semantics=("parallel",),   # independent row tiles -> megacore split
        vmem_limit_bytes=VMEM_LIMIT,
    )


def _round_up(n, m):
    return ((n + m - 1) // m) * m


def _tile_rows(n_rows):
    """Largest sublane-aligned row tile (<= MAX_ROW_TILE) and padded row count."""
    tile = min(MAX_ROW_TILE, _round_up(n_rows, 8))
    return tile, _round_up(n_rows, tile)


def _pad_rows(x2d, n_pad):
    n = x2d.shape[0]
    return x2d if n == n_pad else jnp.pad(x2d, ((0, n_pad - n), (0, 0)))


def _layer_norm_f32(x, g, b):
    """Row-wise LayerNorm over the lane axis; single pass (E[x^2] - mean^2)."""
    mean = jnp.mean(x, axis=-1, keepdims=True)
    var = jnp.maximum(jnp.mean(x * x, axis=-1, keepdims=True) - mean * mean, 0.0)
    return (x - mean) * jax.lax.rsqrt(var + LN_EPS) * g + b


def _dropout_f32(s, u, p):
    keep = u < jnp.float32(1.0 - p)
    return jnp.where(keep, s * jnp.float32(1.0 / (1.0 - p)), 0.0)


# ------------------------------------------------------------------ kernels --
def _fused_train_kernel(x_ref, u_ref, g_ref, b_ref, w_ref, wb_ref, o_ref, *, p):
    """out = x + dropout(LayerNorm(x) @ W + wb), single HBM pass over x."""
    x = x_ref[...].astype(jnp.float32)
    normed = _layer_norm_f32(x, g_ref[...].astype(jnp.float32),
                             b_ref[...].astype(jnp.float32))
    s = jnp.dot(normed, w_ref[...].astype(jnp.float32),
                preferred_element_type=jnp.float32,
                precision=_HIGHEST) + wb_ref[...].astype(jnp.float32)
    s = _dropout_f32(s, u_ref[...].astype(jnp.float32), p)
    o_ref[...] = (x + s).astype(o_ref.dtype)


def _fused_eval_kernel(x_ref, g_ref, b_ref, w_ref, wb_ref, o_ref):
    x = x_ref[...].astype(jnp.float32)
    normed = _layer_norm_f32(x, g_ref[...].astype(jnp.float32),
                             b_ref[...].astype(jnp.float32))
    s = jnp.dot(normed, w_ref[...].astype(jnp.float32),
                preferred_element_type=jnp.float32,
                precision=_HIGHEST) + wb_ref[...].astype(jnp.float32)
    o_ref[...] = (x + s).astype(o_ref.dtype)


def _layernorm_kernel(x_ref, g_ref, b_ref, o_ref):
    x = x_ref[...].astype(jnp.float32)
    o_ref[...] = _layer_norm_f32(x, g_ref[...].astype(jnp.float32),
                                 b_ref[...].astype(jnp.float32)).astype(o_ref.dtype)


def _residual_dropout_train_kernel(x_ref, s_ref, u_ref, o_ref, *, p):
    x = x_ref[...].astype(jnp.float32)
    s = _dropout_f32(s_ref[...].astype(jnp.float32),
                     u_ref[...].astype(jnp.float32), p)
    o_ref[...] = (x + s).astype(o_ref.dtype)


def _residual_add_kernel(x_ref, s_ref, o_ref):
    o_ref[...] = (x_ref[...].astype(jnp.float32)
                  + s_ref[...].astype(jnp.float32)).astype(o_ref.dtype)


# ----------------------------------------------------------------- wrappers --
def sublayer_fused_linear(x, params, W, wb, *, dropout_p=DROPOUT_P,
                          training=True, dropout_u=None):
    """Fused fast path: x + dropout(LayerNorm(x) @ W + wb).  x: (B, S, D)."""
    b, s, d = x.shape
    n = b * s
    tile, n_pad = _tile_rows(n)
    grid = (n_pad // tile,)

    x2d = _pad_rows(x.reshape(n, d), n_pad)
    gamma = params["ln_gamma"].reshape(1, d)
    beta = params["ln_beta"].reshape(1, d)
    wb2 = wb.reshape(1, d)

    row_spec = pl.BlockSpec((tile, d), lambda i: (i, 0))
    # Constant block index -> these stay VMEM-resident (no per-step re-copy).
    vec_spec = pl.BlockSpec((1, d), lambda i: (0, 0))
    mat_spec = pl.BlockSpec((d, d), lambda i: (0, 0))

    if training and dropout_p > 0.0:
        assert dropout_u is not None, "training mode needs dropout uniforms"
        u2d = _pad_rows(dropout_u.reshape(n, d).astype(jnp.float32), n_pad)
        out = pl.pallas_call(
            functools.partial(_fused_train_kernel, p=float(dropout_p)),
            out_shape=jax.ShapeDtypeStruct((n_pad, d), x.dtype),
            grid=grid,
            in_specs=[row_spec, row_spec, vec_spec, vec_spec, mat_spec, vec_spec],
            out_specs=row_spec,
            compiler_params=_compiler_params(),
        )(x2d, u2d, gamma, beta, W, wb2)
    else:
        out = pl.pallas_call(
            _fused_eval_kernel,
            out_shape=jax.ShapeDtypeStruct((n_pad, d), x.dtype),
            grid=grid,
            in_specs=[row_spec, vec_spec, vec_spec, mat_spec, vec_spec],
            out_specs=row_spec,
            compiler_params=_compiler_params(),
        )(x2d, gamma, beta, W, wb2)
    return out[:n].reshape(b, s, d)


def layer_norm_pallas(x2d, gamma, beta):
    n, d = x2d.shape
    tile, n_pad = _tile_rows(n)
    row_spec = pl.BlockSpec((tile, d), lambda i: (i, 0))
    vec_spec = pl.BlockSpec((1, d), lambda i: (0, 0))
    out = pl.pallas_call(
        _layernorm_kernel,
        out_shape=jax.ShapeDtypeStruct((n_pad, d), x2d.dtype),
        grid=(n_pad // tile,),
        in_specs=[row_spec, vec_spec, vec_spec],
        out_specs=row_spec,
        compiler_params=_compiler_params(),
    )(_pad_rows(x2d, n_pad), gamma.reshape(1, d), beta.reshape(1, d))
    return out[:n]


def residual_dropout_pallas(x2d, s2d, *, p, training, dropout_u2d=None):
    n, d = x2d.shape
    tile, n_pad = _tile_rows(n)
    grid = (n_pad // tile,)
    row_spec = pl.BlockSpec((tile, d), lambda i: (i, 0))
    xp = _pad_rows(x2d, n_pad)
    sp = _pad_rows(s2d, n_pad)
    if training and p > 0.0:
        assert dropout_u2d is not None, "training mode needs dropout uniforms"
        up = _pad_rows(dropout_u2d.astype(jnp.float32), n_pad)
        out = pl.pallas_call(
            functools.partial(_residual_dropout_train_kernel, p=float(p)),
            out_shape=jax.ShapeDtypeStruct((n_pad, d), x2d.dtype),
            grid=grid,
            in_specs=[row_spec, row_spec, row_spec],
            out_specs=row_spec,
            compiler_params=_compiler_params(),
        )(xp, sp, up)
    else:
        out = pl.pallas_call(
            _residual_add_kernel,
            out_shape=jax.ShapeDtypeStruct((n_pad, d), x2d.dtype),
            grid=grid,
            in_specs=[row_spec, row_spec],
            out_specs=row_spec,
            compiler_params=_compiler_params(),
        )(xp, sp)
    return out[:n]


def sub_layer_forward(x, sub_layer_fn, params, *, dropout_p=DROPOUT_P,
                      training=True, dropout_u=None):
    """Generic path: x + dropout(sub_layer_fn(LayerNorm(x))) for any JAX callable."""
    b, s, d = x.shape
    x2d = x.reshape(b * s, d)
    normed = layer_norm_pallas(x2d, params["ln_gamma"], params["ln_beta"])
    sub_out = sub_layer_fn(normed.reshape(b, s, d)).reshape(b * s, d)
    u2d = None if dropout_u is None else dropout_u.reshape(b * s, d)
    out2d = residual_dropout_pallas(x2d, sub_out, p=dropout_p,
                                    training=training, dropout_u2d=u2d)
    return out2d.reshape(b, s, d)


# --------------------------------------------------------------------- main --
if __name__ == "__main__":
    key = jax.random.PRNGKey(0)
    k_x, k_w, k_b, k_g, k_beta, k_u = jax.random.split(key, 6)

    B, S, D = 2, 8, D_MODEL
    x = jax.random.normal(k_x, (B, S, D), dtype=jnp.float32)

    # SubLayer params (non-trivial gamma/beta so LayerNorm affine is exercised).
    params = {
        "ln_gamma": 1.0 + 0.1 * jax.random.normal(k_g, (D,), jnp.float32),
        "ln_beta": 0.1 * jax.random.normal(k_beta, (D,), jnp.float32),
    }

    # Demo sub_layer: deterministic Linear(D, D).
    W = jax.random.normal(k_w, (D, D), dtype=jnp.float32) * 0.05
    wb = jax.random.normal(k_b, (D,), dtype=jnp.float32) * 0.05
    sub_layer_fn = lambda h: jnp.dot(h, W, precision=_HIGHEST) + wb

    # Dropout uniforms shared by kernels and reference (train mode exactly checkable).
    u = jax.random.uniform(k_u, (B, S, D), dtype=jnp.float32)

    def ref_forward(x, *, training):
        mu = jnp.mean(x, axis=-1, keepdims=True)
        var = jnp.mean((x - mu) ** 2, axis=-1, keepdims=True)
        normed = (x - mu) / jnp.sqrt(var + LN_EPS) * params["ln_gamma"] + params["ln_beta"]
        s = sub_layer_fn(normed)
        if training and DROPOUT_P > 0.0:
            s = jnp.where(u < 1.0 - DROPOUT_P, s / (1.0 - DROPOUT_P), 0.0)
        return x + s

    # Fused fast path (single pallas_call).
    y_train = sublayer_fused_linear(x, params, W, wb, dropout_p=DROPOUT_P,
                                    training=True, dropout_u=u)
    y_eval = sublayer_fused_linear(x, params, W, wb, dropout_p=DROPOUT_P,
                                   training=False)
    jax.block_until_ready((y_train, y_eval))

    # Generic path (arbitrary external sub_layer callable).
    y_train_g = sub_layer_forward(x, sub_layer_fn, params, dropout_p=DROPOUT_P,
                                  training=True, dropout_u=u)
    y_eval_g = sub_layer_forward(x, sub_layer_fn, params, dropout_p=DROPOUT_P,
                                 training=False)
    jax.block_until_ready((y_train_g, y_eval_g))

    assert y_train.shape == (B, S, D)
    assert jnp.allclose(y_train, ref_forward(x, training=True), atol=1e-4, rtol=1e-4)
    assert jnp.allclose(y_eval, ref_forward(x, training=False), atol=1e-4, rtol=1e-4)
    assert jnp.allclose(y_train_g, ref_forward(x, training=True), atol=1e-4, rtol=1e-4)
    assert jnp.allclose(y_eval_g, ref_forward(x, training=False), atol=1e-4, rtol=1e-4)

    print("KERNEL_OK")
</pallas_src>

<mosaic_0001>
module attributes {stable_mosaic.version = 11 : i64} {
  func.func @_fused_train_kernel(%arg0: i32, %arg1: memref<16x128xf32, #tpu.memory_space<vmem>>, %arg2: memref<16x128xf32, #tpu.memory_space<vmem>>, %arg3: memref<1x128xf32, #tpu.memory_space<vmem>>, %arg4: memref<1x128xf32, #tpu.memory_space<vmem>>, %arg5: memref<128x128xf32, #tpu.memory_space<vmem>>, %arg6: memref<1x128xf32, #tpu.memory_space<vmem>>, %arg7: memref<16x128xf32, #tpu.memory_space<vmem>>) attributes {dimension_semantics = [#tpu.dimension_semantics<parallel>], iteration_bounds = array<i64: 1>, scalar_prefetch = 0 : i64, scratch_operands = 0 : i64, tpu.core_type = #tpu.core_type<tc>, window_params = [{transform_indices = @transform_0, window_bounds = array<i64: 16, 128>}, {transform_indices = @transform_1, window_bounds = array<i64: 16, 128>}, {pipeline_mode = #tpu.pipeline_mode<synchronous>, transform_indices = @transform_2, window_bounds = array<i64: 1, 128>}, {pipeline_mode = #tpu.pipeline_mode<synchronous>, transform_indices = @transform_3, window_bounds = array<i64: 1, 128>}, {pipeline_mode = #tpu.pipeline_mode<synchronous>, transform_indices = @transform_4, window_bounds = array<i64: 128, 128>}, {pipeline_mode = #tpu.pipeline_mode<synchronous>, transform_indices = @transform_5, window_bounds = array<i64: 1, 128>}, {transform_indices = @transform_6, window_bounds = array<i64: 16, 128>}]} {
    %c0 = arith.constant 0 : index
    %c0_0 = arith.constant 0 : index
    %0 = vector.load %arg1[%c0, %c0_0] : memref<16x128xf32, #tpu.memory_space<vmem>>, vector<16x128xf32>
    %c0_1 = arith.constant 0 : index
    %c0_2 = arith.constant 0 : index
    %1 = vector.load %arg3[%c0_1, %c0_2] : memref<1x128xf32, #tpu.memory_space<vmem>>, vector<1x128xf32>
    %c0_3 = arith.constant 0 : index
    %c0_4 = arith.constant 0 : index
    %2 = vector.load %arg4[%c0_3, %c0_4] : memref<1x128xf32, #tpu.memory_space<vmem>>, vector<1x128xf32>
    %cst = arith.constant dense<0.000000e+00> : vector<16xf32>
    %3 = vector.multi_reduction <add>, %0, %cst [1] : vector<16x128xf32> to vector<16xf32>
    %4 = vector.shape_cast %3 : vector<16xf32> to vector<16x1xf32>
    %cst_5 = arith.constant 1.280000e+02 : f32
    %5 = vector.broadcast %cst_5 : f32 to vector<16x1xf32>
    %6 = arith.divf %4, %5 : vector<16x1xf32>
    %7 = arith.mulf %0, %0 : vector<16x128xf32>
    %cst_6 = arith.constant dense<0.000000e+00> : vector<16xf32>
    %8 = vector.multi_reduction <add>, %7, %cst_6 [1] : vector<16x128xf32> to vector<16xf32>
    %9 = vector.shape_cast %8 : vector<16xf32> to vector<16x1xf32>
    %cst_7 = arith.constant 1.280000e+02 : f32
    %10 = vector.broadcast %cst_7 : f32 to vector<16x1xf32>
    %11 = arith.divf %9, %10 : vector<16x1xf32>
    %12 = arith.mulf %6, %6 : vector<16x1xf32>
    %13 = arith.subf %11, %12 : vector<16x1xf32>
    %cst_8 = arith.constant 0.000000e+00 : f32
    %14 = vector.broadcast %cst_8 : f32 to vector<16x1xf32>
    %15 = arith.maximumf %13, %14 : vector<16x1xf32>
    %16 = vector.broadcast %6 : vector<16x1xf32> to vector<16x128xf32>
    %17 = arith.subf %0, %16 : vector<16x128xf32>
    %cst_9 = arith.constant 9.99999974E-6 : f32
    %18 = vector.broadcast %cst_9 : f32 to vector<16x1xf32>
    %19 = arith.addf %15, %18 : vector<16x1xf32>
    %20 = math.rsqrt %19 : vector<16x1xf32>
    %21 = vector.broadcast %20 : vector<16x1xf32> to vector<16x128xf32>
    %22 = arith.mulf %17, %21 : vector<16x128xf32>
    %23 = vector.broadcast %1 : vector<1x128xf32> to vector<16x128xf32>
    %24 = arith.mulf %22, %23 : vector<16x128xf32>
    %25 = vector.broadcast %2 : vector<1x128xf32> to vector<16x128xf32>
    %26 = arith.addf %24, %25 : vector<16x128xf32>
    %c0_10 = arith.constant 0 : index
    %c0_11 = arith.constant 0 : index
    %27 = vector.load %arg5[%c0_10, %c0_11] : memref<128x128xf32, #tpu.memory_space<vmem>>, vector<128x128xf32>
    %cst_12 = arith.constant dense<0.000000e+00> : vector<16x128xf32>
    %28 = tpu.matmul %26, %27, %cst_12 {dimension_numbers = #tpu.dot_dimension_numbers<[1], [0], [0], [1], [0, 0, 1, 1], [], []>, precision = #tpu.contract_precision<fp32>} : vector<16x128xf32>, vector<128x128xf32>, vector<16x128xf32> -> vector<16x128xf32>
    %c0_13 = arith.constant 0 : index
    %c0_14 = arith.constant 0 : index
    %29 = vector.load %arg6[%c0_13, %c0_14] : memref<1x128xf32, #tpu.memory_space<vmem>>, vector<1x128xf32>
    %30 = vector.broadcast %29 : vector<1x128xf32> to vector<16x128xf32>
    %31 = arith.addf %28, %30 : vector<16x128xf32>
    %c0_15 = arith.constant 0 : index
    %c0_16 = arith.constant 0 : index
    %32 = vector.load %arg2[%c0_15, %c0_16] : memref<16x128xf32, #tpu.memory_space<vmem>>, vector<16x128xf32>
    %cst_17 = arith.constant 5.000000e-01 : f32
    %33 = vector.broadcast %cst_17 : f32 to vector<16x128xf32>
    %34 = arith.cmpf olt, %32, %33 : vector<16x128xf32>
    %cst_18 = arith.constant 2.000000e+00 : f32
    %35 = vector.broadcast %cst_18 : f32 to vector<16x128xf32>
    %36 = arith.mulf %31, %35 : vector<16x128xf32>
    %cst_19 = arith.constant 0.000000e+00 : f32
    %37 = vector.broadcast %cst_19 : f32 to vector<16x128xf32>
    %38 = arith.select %34, %36, %37 : vector<16x128xi1>, vector<16x128xf32>
    %39 = arith.addf %0, %38 : vector<16x128xf32>
    %c0_20 = arith.constant 0 : index
    %c0_21 = arith.constant 0 : index
    %40 = vector.load %arg7[%c0_20, %c0_21] : memref<16x128xf32, #tpu.memory_space<vmem>>, vector<16x128xf32>
    tpu.vector_store %arg7[%c0_20, %c0_21], %39 {strides = array<i32>} : memref<16x128xf32, #tpu.memory_space<vmem>>, vector<16x128xf32>,
    return
  }
  func.func @transform_0(%arg0: i32) -> (i32, i32) {
    %c0_i32 = arith.constant 0 : i32
    %c0_i32_0 = arith.constant 0 : i32
    return %arg0, %c0_i32 : i32, i32
  }
  func.func @transform_1(%arg0: i32) -> (i32, i32) {
    %c0_i32 = arith.constant 0 : i32
    %c0_i32_0 = arith.constant 0 : i32
    return %arg0, %c0_i32 : i32, i32
  }
  func.func @transform_2(%arg0: i32) -> (i32, i32) {
    %c0_i32 = arith.constant 0 : i32
    %c0_i32_0 = arith.constant 0 : i32
    %c0_i32_1 = arith.constant 0 : i32
    return %c0_i32, %c0_i32_0 : i32, i32
  }
  func.func @transform_3(%arg0: i32) -> (i32, i32) {
    %c0_i32 = arith.constant 0 : i32
    %c0_i32_0 = arith.constant 0 : i32
    %c0_i32_1 = arith.constant 0 : i32
    return %c0_i32, %c0_i32_0 : i32, i32
  }
  func.func @transform_4(%arg0: i32) -> (i32, i32) {
    %c0_i32 = arith.constant 0 : i32
    %c0_i32_0 = arith.constant 0 : i32
    %c0_i32_1 = arith.constant 0 : i32
    return %c0_i32, %c0_i32_0 : i32, i32
  }
  func.func @transform_5(%arg0: i32) -> (i32, i32) {
    %c0_i32 = arith.constant 0 : i32
    %c0_i32_0 = arith.constant 0 : i32
    %c0_i32_1 = arith.constant 0 : i32
    return %c0_i32, %c0_i32_0 : i32, i32
  }
  func.func @transform_6(%arg0: i32) -> (i32, i32) {
    %c0_i32 = arith.constant 0 : i32
    %c0_i32_0 = arith.constant 0 : i32
    return %arg0, %c0_i32 : i32, i32
  }
}

</mosaic_0001>

<llo_original>
// kernel: tpu_custom_call.1
$region0: #{tpu_custom_call.1}
  #allocation0 [shape = 'u32[]', space=smem, size = 0x4, offset = 0x4, fixed_abs, tag = 'smem constant byte address 0x4 - core index']
  #allocation1 [shape = 'u32[72,128]{1,0:T(1,128)}', space=vmem, size = 0x9000, scoped, tag = 'internal scratch']
  %s0 = inlined_call_operand.hbm [shape: f32[16,128], index: 0, kind: input, shape index: {}]
  %s1 = inlined_call_operand.hbm [shape: f32[16,128], index: 1, kind: input, shape index: {}]
  %s2 = inlined_call_operand.vmem [shape: f32[1,128], index: 2, kind: input, shape index: {}]
  %s3 = inlined_call_operand.vmem [shape: f32[1,128], index: 3, kind: input, shape index: {}]
  %s4 = inlined_call_operand.hbm [shape: f32[128,128], index: 4, kind: input, shape index: {}]
  %s5 = inlined_call_operand.vmem [shape: f32[1,128], index: 5, kind: input, shape index: {}]
  %s6 = inlined_call_operand.hbm [shape: f32[16,128], index: 6, kind: output, shape index: {}]
  %s7 = sld [smem:[#allocation0]]
  $region46: #{tpu_custom_call.1} parent=0
    _
  %s9 = ssub.s32 1, %s7
  %s10 = scalar_select 0, %s9, %s7
  $region1: #{tpu_custom_call.1} parent=0
    #allocation2 [shape = 'u8[8192]{0}', space=vmem, size = 0x2000, scoped, tag = 'input window, operand 0, single buffered']
    #allocation3 [shape = 's32[1]{0}', space=sflag, size = 0x4, scoped, tag = 'scoped memory for tpu_custom_call.1']
    #allocation4 [shape = 's32[1]{0}', space=sflag, size = 0x4, scoped, tag = 'scoped memory for tpu_custom_call.1']
    #allocation5 [shape = 'u8[8192]{0}', space=vmem, size = 0x2000, scoped, tag = 'input window, operand 1, single buffered']
    #allocation6 [shape = 's32[1]{0}', space=sflag, size = 0x4, scoped, tag = 'scoped memory for tpu_custom_call.1']
    #allocation7 [shape = 'u8[65536]{0}', space=vmem, size = 0x10000, scoped, tag = 'input window, operand 4, single buffered']
    #allocation8 [shape = 'u8[8192]{0}', space=vmem, size = 0x2000, scoped, tag = 'output window, operand 0, single buffered']
    %11 = vsyncpa [#allocation3], 0
    %12 = vsyncpa [#allocation6], 0
    %13 = vsyncpa [#allocation4], 0
    // Predicated region
    $region2: #{tpu_custom_call.1} parent=1 // pred_check
      _
    $region3: #{tpu_custom_call.1} parent=1 // pred_check_branch
      %15 = sbr.rel (0) target = $region5
    $region4: #{tpu_custom_call.1} parent=1 // pred_region
      %17 = vsyncadd [#allocation3], 0
      %s18 = sshll.u32 %s0, 4
      %s19 = int_to_ptr.hbm [resolvable:$true] %s18
      %s20 = sshll.u32 [#allocation2], 4
      %s21 = int_to_ptr.vmem [resolvable:$true] %s20
      %26 = dma.hbm_to_vmem [thread:$0]  %s19, 256, %s21, [#allocation3], 128, 128, 8
    $region5: #{tpu_custom_call.1} parent=1 // pred_fallthru
      _
    // Predicated region
    $region6: #{tpu_custom_call.1} parent=1 // pred_check
      _
    $region7: #{tpu_custom_call.1} parent=1 // pred_check_branch
      %28 = sbr.rel (0) target = $region9
    $region8: #{tpu_custom_call.1} parent=1 // pred_region
      %30 = vsyncadd [#allocation6], 0
      %s31 = sshll.u32 %s1, 4
      %s32 = int_to_ptr.hbm [resolvable:$true] %s31
      %s33 = sshll.u32 [#allocation5], 4
      %s34 = int_to_ptr.vmem [resolvable:$true] %s33
      %39 = dma.hbm_to_vmem [thread:$0]  %s32, 256, %s34, [#allocation6], 128, 128, 8
    $region9: #{tpu_custom_call.1} parent=1 // pred_fallthru
      _
    // Predicated region
    $region10: #{tpu_custom_call.1} parent=1 // pred_check
      _
    $region11: #{tpu_custom_call.1} parent=1 // pred_check_branch
      %41 = sbr.rel (0) target = $region13
    $region12: #{tpu_custom_call.1} parent=1 // pred_region
      _
    $region13: #{tpu_custom_call.1} parent=1 // pred_fallthru
      _
    // Predicated region
    $region14: #{tpu_custom_call.1} parent=1 // pred_check
      _
    $region15: #{tpu_custom_call.1} parent=1 // pred_check_branch
      %43 = sbr.rel (0) target = $region17
    $region16: #{tpu_custom_call.1} parent=1 // pred_region
      _
    $region17: #{tpu_custom_call.1} parent=1 // pred_fallthru
      _
    // Predicated region
    $region18: #{tpu_custom_call.1} parent=1 // pred_check
      _
    $region19: #{tpu_custom_call.1} parent=1 // pred_check_branch
      %45 = sbr.rel (0) target = $region21
    $region20: #{tpu_custom_call.1} parent=1 // pred_region
      %47 = vsyncadd [#allocation6], 0
      %s48 = sshll.u32 %s4, 4
      %s49 = int_to_ptr.hbm [resolvable:$true] %s48
      %s50 = sshll.u32 [#allocation7], 4
      %s51 = int_to_ptr.vmem [resolvable:$true] %s50
      %56 = dma.hbm_to_vmem [thread:$0]  %s49, 2048, %s51, [#allocation6], 128, 128, 8
    $region21: #{tpu_custom_call.1} parent=1 // pred_fallthru
      _
    // Predicated region
    $region22: #{tpu_custom_call.1} parent=1 // pred_check
      _
    $region23: #{tpu_custom_call.1} parent=1 // pred_check_branch
      %58 = sbr.rel (0) target = $region25
    $region24: #{tpu_custom_call.1} parent=1 // pred_region
      _
    $region25: #{tpu_custom_call.1} parent=1 // pred_fallthru
      _
    // Predicated region
    $region26: #{tpu_custom_call.1} parent=1 // pred_check
      _
    $region27: #{tpu_custom_call.1} parent=1 // pred_check_branch
      %60 = sbr.rel (0) target = $region29
    $region28: #{tpu_custom_call.1} parent=1 // pred_region
      %62 = dma.done [#allocation3], 256
    $region29: #{tpu_custom_call.1} parent=1 // pred_fallthru
      _
    // Predicated region
    $region30: #{tpu_custom_call.1} parent=1 // pred_check
      _
    $region31: #{tpu_custom_call.1} parent=1 // pred_check_branch
      %64 = sbr.rel (0) target = $region33
    $region32: #{tpu_custom_call.1} parent=1 // pred_region
      %66 = dma.done [#allocation6], 256
    $region33: #{tpu_custom_call.1} parent=1 // pred_fallthru
      _
    // Predicated region
    $region34: #{tpu_custom_call.1} parent=1 // pred_check
      _
    $region35: #{tpu_custom_call.1} parent=1 // pred_check_branch
      %68 = sbr.rel (0) target = $region37
    $region36: #{tpu_custom_call.1} parent=1 // pred_region
      %70 = dma.done [#allocation6], 2048
    $region37: #{tpu_custom_call.1} parent=1 // pred_fallthru
      _
    %v71 = vld [vmem:[#allocation2] sm:$0xff]
    %v72 = vld [vmem:[#allocation2 + $0x8] sm:$0xff]
    %v73 = vld [vmem:[%s2] sm:$0x1]
    %v74 = vld [vmem:[%s3] sm:$0x1]
    %75 = vadd.xlane.f32.xlu0 %v71
    %v76 = vpop.xlane.xlu0 %75
    %77 = vadd.xlane.f32.xlu0 %v72
    %v78 = vpop.xlane.xlu0 %77
    %v79 = vrcp.pop 128.0
    %v80 = vmul.f32 128.0, %v79
    %v81 = vsub.f32 1.0, %v80
    %v82 = vmul.f32 %v79, %v81
    %v83 = vadd.f32 %v79, %v82
    %vm84 = vweird.f32 %v79
    %v85 = vsel %vm84, %v79, %v83
    %v86 = vmul.f32 %v76, %v85
    %v87 = vmul.f32 %v78, %v85
    %v88 = vmul.f32 %v71, %v71
    %v89 = vmul.f32 %v72, %v72
    %90 = vadd.xlane.f32.xlu0 %v88
    %v91 = vpop.xlane.xlu0 %90
    %92 = vadd.xlane.f32.xlu0 %v89
    %v93 = vpop.xlane.xlu0 %92
    %v94 = vmul.f32 %v91, %v85
    %v95 = vmul.f32 %v93, %v85
    %v96 = vmul.f32 %v86, %v86
    %v97 = vmul.f32 %v87, %v87
    %v98 = vsub.f32 %v94, %v96
    %v99 = vsub.f32 %v95, %v97
    %v100 = vmax.f32 %v98, 0.0
    %v101 = vmax.f32 %v99, 0.0
    %v102 = vsub.f32 %v71, %v86
    %v103 = vsub.f32 %v72, %v87
    %v104 = vadd.f32 %v100, 1e-05
    %v105 = vadd.f32 %v101, 1e-05
    %v106 = vrsqrt.pop %v104
    %v107 = vmul.f32 %v106, %v104
    %v108 = vmul.f32 %v107, %v106
    %v109 = vmul.f32 0.5, %v108
    %v110 = vsub.f32 1.5, %v109
    %v111 = vmul.f32 %v106, %v110
    %vm112 = vweird.f32 %v104
    %vm113 = vweird.f32 %v106
    %vm114 = vmor %vm112, %vm113
    %v115 = vsel %vm114, %v106, %v111
    %v116 = vrsqrt.pop %v105
    %v117 = vmul.f32 %v116, %v105
    %v118 = vmul.f32 %v117, %v116
    %v119 = vmul.f32 0.5, %v118
    %v120 = vsub.f32 1.5, %v119
    %v121 = vmul.f32 %v116, %v120
    %vm122 = vweird.f32 %v105
    %vm123 = vweird.f32 %v116
    %vm124 = vmor %vm122, %vm123
    %v125 = vsel %vm124, %v116, %v121
    %v126 = vmul.f32 %v102, %v115
    %v127 = vmul.f32 %v103, %v125
    %v129 = vperm.slane %v73, 0
    %v131 = vmul.f32 %v126, %v129
    %v132 = vmul.f32 %v127, %v129
    %v134 = vperm.slane %v74, 0
    %v136 = vadd.f32 %v131, %v134
    %v137 = vadd.f32 %v132, %v134
    %v138 = vld [vmem:[#allocation7] sm:$0xff]
    %v139 = vld [vmem:[#allocation7 + $0x8] sm:$0xff]
    %v140 = vld [vmem:[#allocation7 + $0x10] sm:$0xff]
    %v141 = vld [vmem:[#allocation7 + $0x18] sm:$0xff]
    %v142 = vld [vmem:[#allocation7 + $0x20] sm:$0xff]
    %v143 = vld [vmem:[#allocation7 + $0x28] sm:$0xff]
    %v144 = vld [vmem:[#allocation7 + $0x30] sm:$0xff]
    %v145 = vld [vmem:[#allocation7 + $0x38] sm:$0xff]
    %v146 = vld [vmem:[#allocation7 + $0x40] sm:$0xff]
    %v147 = vld [vmem:[#allocation7 + $0x48] sm:$0xff]
    %v148 = vld [vmem:[#allocation7 + $0x50] sm:$0xff]
    %v149 = vld [vmem:[#allocation7 + $0x58] sm:$0xff]
    %v150 = vld [vmem:[#allocation7 + $0x60] sm:$0xff]
    %v151 = vld [vmem:[#allocation7 + $0x68] sm:$0xff]
    %v152 = vld [vmem:[#allocation7 + $0x70] sm:$0xff]
    %v153 = vld [vmem:[#allocation7 + $0x78] sm:$0xff]
    %v154 = vld [vmem:[%s5] sm:$0x1]
    %v156 = vperm.slane %v154, 0
    %v158 = vand.u32 %v153, 4294901760
    %159 = vmatpush.msra.mxu0 %v158
    %v160 = vand.u32 %v152, 4294901760
    %161 = vmatpush.msra.mxu0 %v160
    %v162 = vand.u32 %v151, 4294901760
    %163 = vmatpush.msra.mxu0 %v162
    %v164 = vand.u32 %v150, 4294901760
    %165 = vmatpush.msra.mxu0 %v164
    %v166 = vand.u32 %v149, 4294901760
    %167 = vmatpush.msra.mxu0 %v166
    %v168 = vand.u32 %v148, 4294901760
    %169 = vmatpush.msra.mxu0 %v168
    %v170 = vand.u32 %v147, 4294901760
    %171 = vmatpush.msra.mxu0 %v170
    %v172 = vand.u32 %v146, 4294901760
    %173 = vmatpush.msra.mxu0 %v172
    %v174 = vand.u32 %v145, 4294901760
    %175 = vmatpush.msra.mxu0 %v174
    %v176 = vand.u32 %v144, 4294901760
    %177 = vmatpush.msra.mxu0 %v176
    %v178 = vand.u32 %v143, 4294901760
    %179 = vmatpush.msra.mxu0 %v178
    %v180 = vand.u32 %v142, 4294901760
    %181 = vmatpush.msra.mxu0 %v180
    %v182 = vand.u32 %v141, 4294901760
    %183 = vmatpush.msra.mxu0 %v182
    %v184 = vand.u32 %v140, 4294901760
    %185 = vmatpush.msra.mxu0 %v184
    %v186 = vand.u32 %v139, 4294901760
    %187 = vmatpush.msra.mxu0 %v186
    %v188 = vand.u32 %v138, 4294901760
    %189 = vmatpush.msra.mxu0 %v188
    %v190 = vand.u32 %v136, 4294901760
    %v191 = vsub.f32 %v136, %v190
    %v192 = vand.u32 %v191, 4294901760
    %v193 = vsub.f32 %v191, %v192
    %v194 = vand.u32 %v193, 4294901760
    %195 = vmatmul.f32.gmra.mxu0 %v194
    %v196 = vpop.f32.mrf.mxu0
    %v197 = vadd.f32 %v156, %v196
    %v198 = vand.u32 %v137, 4294901760
    %v199 = vsub.f32 %v137, %v198
    %v200 = vand.u32 %v199, 4294901760
    %v201 = vsub.f32 %v199, %v200
    %v202 = vand.u32 %v201, 4294901760
    %203 = vmatmul.f32.gmra.mxu0 %v202
    %v204 = vpop.f32.mrf.mxu0
    %v205 = vadd.f32 %v156, %v204
    %206 = vdwg.mxu0
    %v207 = vand.u32 %v153, 4294901760
    %v208 = vsub.f32 %v153, %v207
    %v209 = vand.u32 %v208, 4294901760
    %v210 = vsub.f32 %v208, %v209
    %v211 = vand.u32 %v210, 4294901760
    %212 = vmatpush.msra.mxu0 %v211
    %v213 = vand.u32 %v152, 4294901760
    %v214 = vsub.f32 %v152, %v213
    %v215 = vand.u32 %v214, 4294901760
    %v216 = vsub.f32 %v214, %v215
    %v217 = vand.u32 %v216, 4294901760
    %218 = vmatpush.msra.mxu0 %v217
    %v219 = vand.u32 %v151, 4294901760
    %v220 = vsub.f32 %v151, %v219
    %v221 = vand.u32 %v220, 4294901760
    %v222 = vsub.f32 %v220, %v221
    %v223 = vand.u32 %v222, 4294901760
    %224 = vmatpush.msra.mxu0 %v223
    %v225 = vand.u32 %v150, 4294901760
    %v226 = vsub.f32 %v150, %v225
    %v227 = vand.u32 %v226, 4294901760
    %v228 = vsub.f32 %v226, %v227
    %v229 = vand.u32 %v228, 4294901760
    %230 = vmatpush.msra.mxu0 %v229
    %v231 = vand.u32 %v149, 4294901760
    %v232 = vsub.f32 %v149, %v231
    %v233 = vand.u32 %v232, 4294901760
    %v234 = vsub.f32 %v232, %v233
    %v235 = vand.u32 %v234, 4294901760
    %236 = vmatpush.msra.mxu0 %v235
    %v237 = vand.u32 %v148, 4294901760
    %v238 = vsub.f32 %v148, %v237
    %v239 = vand.u32 %v238, 4294901760
    %v240 = vsub.f32 %v238, %v239
    %v241 = vand.u32 %v240, 4294901760
    %242 = vmatpush.msra.mxu0 %v241
    %v243 = vand.u32 %v147, 4294901760
    %v244 = vsub.f32 %v147, %v243
    %v245 = vand.u32 %v244, 4294901760
    %v246 = vsub.f32 %v244, %v245
    %v247 = vand.u32 %v246, 4294901760
    %248 = vmatpush.msra.mxu0 %v247
    %v249 = vand.u32 %v146, 4294901760
    %v250 = vsub.f32 %v146, %v249
    %v251 = vand.u32 %v250, 4294901760
    %v252 = vsub.f32 %v250, %v251
    %v253 = vand.u32 %v252, 4294901760
    %254 = vmatpush.msra.mxu0 %v253
    %v255 = vand.u32 %v145, 4294901760
    %v256 = vsub.f32 %v145, %v255
    %v257 = vand.u32 %v256, 4294901760
    %v258 = vsub.f32 %v256, %v257
    %v259 = vand.u32 %v258, 4294901760
    %260 = vmatpush.msra.mxu0 %v259
    %v261 = vand.u32 %v144, 4294901760
    %v262 = vsub.f32 %v144, %v261
    %v263 = vand.u32 %v262, 4294901760
    %v264 = vsub.f32 %v262, %v263
    %v265 = vand.u32 %v264, 4294901760
    %266 = vmatpush.msra.mxu0 %v265
    %v267 = vand.u32 %v143, 4294901760
    %v268 = vsub.f32 %v143, %v267
    %v269 = vand.u32 %v268, 4294901760
    %v270 = vsub.f32 %v268, %v269
    %v271 = vand.u32 %v270, 4294901760
    %272 = vmatpush.msra.mxu0 %v271
    %v273 = vand.u32 %v142, 4294901760
    %v274 = vsub.f32 %v142, %v273
    %v275 = vand.u32 %v274, 4294901760
    %v276 = vsub.f32 %v274, %v275
    %v277 = vand.u32 %v276, 4294901760
    %278 = vmatpush.msra.mxu0 %v277
    %v279 = vand.u32 %v141, 4294901760
    %v280 = vsub.f32 %v141, %v279
    %v281 = vand.u32 %v280, 4294901760
    %v282 = vsub.f32 %v280, %v281
    %v283 = vand.u32 %v282, 4294901760
    %284 = vmatpush.msra.mxu0 %v283
    %v285 = vand.u32 %v140, 4294901760
    %v286 = vsub.f32 %v140, %v285
    %v287 = vand.u32 %v286, 4294901760
    %v288 = vsub.f32 %v286, %v287
    %v289 = vand.u32 %v288, 4294901760
    %290 = vmatpush.msra.mxu0 %v289
    %v291 = vand.u32 %v139, 4294901760
    %v292 = vsub.f32 %v139, %v291
    %v293 = vand.u32 %v292, 4294901760
    %v294 = vsub.f32 %v292, %v293
    %v295 = vand.u32 %v294, 4294901760
    %296 = vmatpush.msra.mxu0 %v295
    %v297 = vand.u32 %v138, 4294901760
    %v298 = vsub.f32 %v138, %v297
    %v299 = vand.u32 %v298, 4294901760
    %v300 = vsub.f32 %v298, %v299
    %v301 = vand.u32 %v300, 4294901760
    %302 = vmatpush.msra.mxu0 %v301
    %v303 = vand.u32 %v136, 4294901760
    %304 = vmatmul.f32.gmra.mxu0 %v303
    %v305 = vpop.f32.mrf.mxu0
    %v306 = vadd.f32 %v197, %v305
    %v307 = vand.u32 %v137, 4294901760
    %308 = vmatmul.f32.gmra.mxu0 %v307
    %v309 = vpop.f32.mrf.mxu0
    %v310 = vadd.f32 %v205, %v309
    %311 = vdwg.mxu0
    %v312 = vand.u32 %v153, 4294901760
    %v313 = vsub.f32 %v153, %v312
    %314 = vmatpush.msra.mxu0 %v313
    %v315 = vand.u32 %v152, 4294901760
    %v316 = vsub.f32 %v152, %v315
    %317 = vmatpush.msra.mxu0 %v316
    %v318 = vand.u32 %v151, 4294901760
    %v319 = vsub.f32 %v151, %v318
    %320 = vmatpush.msra.mxu0 %v319
    %v321 = vand.u32 %v150, 4294901760
    %v322 = vsub.f32 %v150, %v321
    %323 = vmatpush.msra.mxu0 %v322
    %v324 = vand.u32 %v149, 4294901760
    %v325 = vsub.f32 %v149, %v324
    %326 = vmatpush.msra.mxu0 %v325
    %v327 = vand.u32 %v148, 4294901760
    %v328 = vsub.f32 %v148, %v327
    %329 = vmatpush.msra.mxu0 %v328
    %v330 = vand.u32 %v147, 4294901760
    %v331 = vsub.f32 %v147, %v330
    %332 = vmatpush.msra.mxu0 %v331
    %v333 = vand.u32 %v146, 4294901760
    %v334 = vsub.f32 %v146, %v333
    %335 = vmatpush.msra.mxu0 %v334
    %v336 = vand.u32 %v145, 4294901760
    %v337 = vsub.f32 %v145, %v336
    %338 = vmatpush.msra.mxu0 %v337
    %v339 = vand.u32 %v144, 4294901760
    %v340 = vsub.f32 %v144, %v339
    %341 = vmatpush.msra.mxu0 %v340
    %v342 = vand.u32 %v143, 4294901760
    %v343 = vsub.f32 %v143, %v342
    %344 = vmatpush.msra.mxu0 %v343
    %v345 = vand.u32 %v142, 4294901760
    %v346 = vsub.f32 %v142, %v345
    %347 = vmatpush.msra.mxu0 %v346
    %v348 = vand.u32 %v141, 4294901760
    %v349 = vsub.f32 %v141, %v348
    %350 = vmatpush.msra.mxu0 %v349
    %v351 = vand.u32 %v140, 4294901760
    %v352 = vsub.f32 %v140, %v351
    %353 = vmatpush.msra.mxu0 %v352
    %v354 = vand.u32 %v139, 4294901760
    %v355 = vsub.f32 %v139, %v354
    %356 = vmatpush.msra.mxu0 %v355
    %v357 = vand.u32 %v138, 4294901760
    %v358 = vsub.f32 %v138, %v357
    %359 = vmatpush.msra.mxu0 %v358
    %v360 = vand.u32 %v136, 4294901760
    %v361 = vsub.f32 %v136, %v360
    %362 = vmatmul.f32.gmra.mxu0 %v361
    %v363 = vpop.f32.mrf.mxu0
    %v364 = vadd.f32 %v306, %v363
    %v365 = vand.u32 %v137, 4294901760
    %v366 = vsub.f32 %v137, %v365
    %367 = vmatmul.f32.gmra.mxu0 %v366
    %v368 = vpop.f32.mrf.mxu0
    %v369 = vadd.f32 %v310, %v368
    %370 = vdwg.mxu0
    %v371 = vand.u32 %v153, 4294901760
    %372 = vmatpush.msra.mxu0 %v371
    %v373 = vand.u32 %v152, 4294901760
    %374 = vmatpush.msra.mxu0 %v373
    %v375 = vand.u32 %v151, 4294901760
    %376 = vmatpush.msra.mxu0 %v375
    %v377 = vand.u32 %v150, 4294901760
    %378 = vmatpush.msra.mxu0 %v377
    %v379 = vand.u32 %v149, 4294901760
    %380 = vmatpush.msra.mxu0 %v379
    %v381 = vand.u32 %v148, 4294901760
    %382 = vmatpush.msra.mxu0 %v381
    %v383 = vand.u32 %v147, 4294901760
    %384 = vmatpush.msra.mxu0 %v383
    %v385 = vand.u32 %v146, 4294901760
    %386 = vmatpush.msra.mxu0 %v385
    %v387 = vand.u32 %v145, 4294901760
    %388 = vmatpush.msra.mxu0 %v387
    %v389 = vand.u32 %v144, 4294901760
    %390 = vmatpush.msra.mxu0 %v389
    %v391 = vand.u32 %v143, 4294901760
    %392 = vmatpush.msra.mxu0 %v391
    %v393 = vand.u32 %v142, 4294901760
    %394 = vmatpush.msra.mxu0 %v393
    %v395 = vand.u32 %v141, 4294901760
    %396 = vmatpush.msra.mxu0 %v395
    %v397 = vand.u32 %v140, 4294901760
    %398 = vmatpush.msra.mxu0 %v397
    %v399 = vand.u32 %v139, 4294901760
    %400 = vmatpush.msra.mxu0 %v399
    %v401 = vand.u32 %v138, 4294901760
    %402 = vmatpush.msra.mxu0 %v401
    %v403 = vand.u32 %v136, 4294901760
    %v404 = vsub.f32 %v136, %v403
    %v405 = vand.u32 %v404, 4294901760
    %406 = vmatmul.f32.gmra.mxu0 %v405
    %v407 = vpop.f32.mrf.mxu0
    %v408 = vadd.f32 %v364, %v407
    %v409 = vand.u32 %v137, 4294901760
    %v410 = vsub.f32 %v137, %v409
    %v411 = vand.u32 %v410, 4294901760
    %412 = vmatmul.f32.gmra.mxu0 %v411
    %v413 = vpop.f32.mrf.mxu0
    %v414 = vadd.f32 %v369, %v413
    %415 = vdwg.mxu0
    %v416 = vand.u32 %v153, 4294901760
    %v417 = vsub.f32 %v153, %v416
    %v418 = vand.u32 %v417, 4294901760
    %419 = vmatpush.msra.mxu0 %v418
    %v420 = vand.u32 %v152, 4294901760
    %v421 = vsub.f32 %v152, %v420
    %v422 = vand.u32 %v421, 4294901760
    %423 = vmatpush.msra.mxu0 %v422
    %v424 = vand.u32 %v151, 4294901760
    %v425 = vsub.f32 %v151, %v424
    %v426 = vand.u32 %v425, 4294901760
    %427 = vmatpush.msra.mxu0 %v426
    %v428 = vand.u32 %v150, 4294901760
    %v429 = vsub.f32 %v150, %v428
    %v430 = vand.u32 %v429, 4294901760
    %431 = vmatpush.msra.mxu0 %v430
    %v432 = vand.u32 %v149, 4294901760
    %v433 = vsub.f32 %v149, %v432
    %v434 = vand.u32 %v433, 4294901760
    %435 = vmatpush.msra.mxu0 %v434
    %v436 = vand.u32 %v148, 4294901760
    %v437 = vsub.f32 %v148, %v436
    %v438 = vand.u32 %v437, 4294901760
    %439 = vmatpush.msra.mxu0 %v438
    %v440 = vand.u32 %v147, 4294901760
    %v441 = vsub.f32 %v147, %v440
    %v442 = vand.u32 %v441, 4294901760
    %443 = vmatpush.msra.mxu0 %v442
    %v444 = vand.u32 %v146, 4294901760
    %v445 = vsub.f32 %v146, %v444
    %v446 = vand.u32 %v445, 4294901760
    %447 = vmatpush.msra.mxu0 %v446
    %v448 = vand.u32 %v145, 4294901760
    %v449 = vsub.f32 %v145, %v448
    %v450 = vand.u32 %v449, 4294901760
    %451 = vmatpush.msra.mxu0 %v450
    %v452 = vand.u32 %v144, 4294901760
    %v453 = vsub.f32 %v144, %v452
    %v454 = vand.u32 %v453, 4294901760
    %455 = vmatpush.msra.mxu0 %v454
    %v456 = vand.u32 %v143, 4294901760
    %v457 = vsub.f32 %v143, %v456
    %v458 = vand.u32 %v457, 4294901760
    %459 = vmatpush.msra.mxu0 %v458
    %v460 = vand.u32 %v142, 4294901760
    %v461 = vsub.f32 %v142, %v460
    %v462 = vand.u32 %v461, 4294901760
    %463 = vmatpush.msra.mxu0 %v462
    %v464 = vand.u32 %v141, 4294901760
    %v465 = vsub.f32 %v141, %v464
    %v466 = vand.u32 %v465, 4294901760
    %467 = vmatpush.msra.mxu0 %v466
    %v468 = vand.u32 %v140, 4294901760
    %v469 = vsub.f32 %v140, %v468
    %v470 = vand.u32 %v469, 4294901760
    %471 = vmatpush.msra.mxu0 %v470
    %v472 = vand.u32 %v139, 4294901760
    %v473 = vsub.f32 %v139, %v472
    %v474 = vand.u32 %v473, 4294901760
    %475 = vmatpush.msra.mxu0 %v474
    %v476 = vand.u32 %v138, 4294901760
    %v477 = vsub.f32 %v138, %v476
    %v478 = vand.u32 %v477, 4294901760
    %479 = vmatpush.msra.mxu0 %v478
    %v480 = vand.u32 %v136, 4294901760
    %481 = vmatmul.f32.gmra.mxu0 %v480
    %v482 = vpop.f32.mrf.mxu0
    %v483 = vadd.f32 %v408, %v482
    %v484 = vand.u32 %v137, 4294901760
    %485 = vmatmul.f32.gmra.mxu0 %v484
    %v486 = vpop.f32.mrf.mxu0
    %v487 = vadd.f32 %v414, %v486
    %488 = vdwg.mxu0
    %v489 = vand.u32 %v153, 4294901760
    %490 = vmatpush.msra.mxu0 %v489
    %v491 = vand.u32 %v152, 4294901760
    %492 = vmatpush.msra.mxu0 %v491
    %v493 = vand.u32 %v151, 4294901760
    %494 = vmatpush.msra.mxu0 %v493
    %v495 = vand.u32 %v150, 4294901760
    %496 = vmatpush.msra.mxu0 %v495
    %v497 = vand.u32 %v149, 4294901760
    %498 = vmatpush.msra.mxu0 %v497
    %v499 = vand.u32 %v148, 4294901760
    %500 = vmatpush.msra.mxu0 %v499
    %v501 = vand.u32 %v147, 4294901760
    %502 = vmatpush.msra.mxu0 %v501
    %v503 = vand.u32 %v146, 4294901760
    %504 = vmatpush.msra.mxu0 %v503
    %v505 = vand.u32 %v145, 4294901760
    %506 = vmatpush.msra.mxu0 %v505
    %v507 = vand.u32 %v144, 4294901760
    %508 = vmatpush.msra.mxu0 %v507
    %v509 = vand.u32 %v143, 4294901760
    %510 = vmatpush.msra.mxu0 %v509
    %v511 = vand.u32 %v142, 4294901760
    %512 = vmatpush.msra.mxu0 %v511
    %v513 = vand.u32 %v141, 4294901760
    %514 = vmatpush.msra.mxu0 %v513
    %v515 = vand.u32 %v140, 4294901760
    %516 = vmatpush.msra.mxu0 %v515
    %v517 = vand.u32 %v139, 4294901760
    %518 = vmatpush.msra.mxu0 %v517
    %v519 = vand.u32 %v138, 4294901760
    %520 = vmatpush.msra.mxu0 %v519
    %v521 = vand.u32 %v136, 4294901760
    %522 = vmatmul.f32.gmra.mxu0 %v521
    %v523 = vpop.f32.mrf.mxu0
    %v524 = vadd.f32 %v483, %v523
    %v525 = vand.u32 %v137, 4294901760
    %526 = vmatmul.f32.gmra.mxu0 %v525
    %v527 = vpop.f32.mrf.mxu0
    %v528 = vadd.f32 %v487, %v527
    %529 = vdwg.mxu0
    %v530 = vld [vmem:[#allocation5] sm:$0xff]
    %v531 = vld [vmem:[#allocation5 + $0x8] sm:$0xff]
    %vm532 = vcmp.lt.f32.partialorder %v530, 0.5
    %vm533 = vcmp.lt.f32.partialorder %v531, 0.5
    %v534 = vmul.f32 %v524, 2.0
    %v535 = vmul.f32 %v528, 2.0
    %v536 = vsel %vm532, %v534, 0.0
    %v537 = vsel %vm533, %v535, 0.0
    %v538 = vadd.f32 %v71, %v536
    %v539 = vadd.f32 %v72, %v537
    %540 = vst [vmem:[#allocation8] sm:$0xff] %v538
    %541 = vst [vmem:[#allocation8 + $0x8] sm:$0xff] %v539
    // Predicated region
    $region38: #{tpu_custom_call.1} parent=1 // pred_check
      _
    $region39: #{tpu_custom_call.1} parent=1 // pred_check_branch
      %543 = sbr.rel (0) target = $region41
    $region40: #{tpu_custom_call.1} parent=1 // pred_region
      %545 = vsyncadd [#allocation4], 0
      %s546 = sshll.u32 [#allocation8], 4
      %s547 = int_to_ptr.vmem [resolvable:$true] %s546
      %s548 = sshll.u32 %s6, 4
      %s549 = int_to_ptr.hbm [resolvable:$true] %s548
      %554 = dma.vmem_to_hbm [thread:$0]  %s547, 256, %s549, [#allocation4], 128, 128, 8
    $region41: #{tpu_custom_call.1} parent=1 // pred_fallthru
      _
    // Predicated region
    $region42: #{tpu_custom_call.1} parent=1 // pred_check
      _
    $region43: #{tpu_custom_call.1} parent=1 // pred_check_branch
      %556 = sbr.rel (0) target = $region45
    $region44: #{tpu_custom_call.1} parent=1 // pred_region
      %558 = dma.done [#allocation4], 256
    $region45: #{tpu_custom_call.1} parent=1 // pred_fallthru
      _
    %559 = vsyncpa [#allocation3], 1
    %560 = vsyncpa [#allocation6], 1
    %561 = vsyncpa [#allocation4], 1

</llo_original>
